<compile_context>
chip_gen: v7x
topology: tpu7x:2x2x1
jax: 0.10.0
libtpu: 0.0.40
codegen_flags: <defaults>
</compile_context>

<pallas_src>
import jax
import jax.numpy as jnp
from jax import lax
from jax.experimental import pallas as pl
from jax.experimental.pallas import tpu as pltpu

LANES = 128
SUBLANES = 8
MAX_TILE_ROWS = 8192      # 8192 * 128 * 4 B = 4 MiB per f32 input block
SMALL_MAX_ROWS = 1024     # at/below this: single block, single chunk
CHUNK_ROWS = 128          # in-kernel sub-chunk (keeps intermediates vreg-sized)
NUM_CORES = 2             # leading "parallel" grid axis (v7x megacore split)


def _cdiv(a, b):
    return -(-a // b)


def _round_up(x, m):
    return _cdiv(x, m) * m


def _make_kernel(valid_rows, tile_rows, chunk_rows, needs_mask, y_is_float):
    n_chunks = tile_rows // chunk_rows
    assert n_chunks * chunk_rows == tile_rows
    assert chunk_rows % SUBLANES == 0
    groups = chunk_rows // SUBLANES

    def kernel(p_ref, y_ref, bce_out, fp_out):
        c = pl.program_id(0)
        i = pl.program_id(1)
        inner = pl.num_programs(1)

        @pl.when(i == 0)
        def _():
            bce_out[...] = jnp.zeros_like(bce_out)
            fp_out[...] = jnp.zeros_like(fp_out)

        # Logical (unclamped) first row of this grid step.  The index_map clamps
        # the DMA so it never walks off the array; any over-read rows (ragged
        # last block or a fully duplicated clamped block) are zeroed by the mask.
        base_row = (c * inner + i) * tile_rows

        if needs_mask:
            row_iota = lax.broadcasted_iota(jnp.int32, (chunk_rows, LANES), 0)
            rows_left = valid_rows - base_row  # may be <= 0 for duplicate blocks

        def process(k, carry):
            bce_c, fp_c = carry
            r0 = k * chunk_rows
            if not isinstance(r0, int):
                r0 = pl.multiple_of(r0, chunk_rows)
            p = p_ref[pl.ds(r0, chunk_rows), :].astype(jnp.float32)
            y = y_ref[pl.ds(r0, chunk_rows), :]
            if y_is_float:
                pos = y.astype(jnp.float32) > 0.5     # f32 math everywhere (v5e-safe)
            else:
                pos = y != 0
            # Single log per element via select (labels assumed to be {0,1},
            # matching the PyTorch reference; soft labels are not supported).
            sel = jnp.where(pos, p, 1.0 - p)
            fp_hit = jnp.logical_and(p >= 0.5, jnp.logical_not(pos))
            if needs_mask:
                valid = row_iota < (rows_left - r0)
                sel = jnp.where(valid, sel, 1.0)       # log(1) == 0
                fp_hit = jnp.logical_and(fp_hit, valid)
            # PyTorch BCELoss clamps each log at -100; the sign / mean are
            # applied in the wrapper.
            logt = jnp.maximum(jnp.log(sel), -100.0)
            fpt = fp_hit.astype(jnp.float32)
            # Pure VPU accumulation into (8,128) carries; no cross-lane reduce
            # inside the kernel (done once, on tiny arrays, in the wrapper).
            bce_c = bce_c + jnp.sum(logt.reshape(groups, SUBLANES, LANES), axis=0)
            fp_c = fp_c + jnp.sum(fpt.reshape(groups, SUBLANES, LANES), axis=0)
            return bce_c, fp_c

        zero = jnp.zeros((SUBLANES, LANES), jnp.float32)
        if n_chunks == 1:
            bce_c, fp_c = process(0, (zero, zero))
        else:
            bce_c, fp_c = lax.fori_loop(0, n_chunks, process, (zero, zero),
                                        unroll=2)

        bce_out[0] += bce_c
        fp_out[0] += fp_c

    return kernel


def custom_loss(outputs, labels, lambda_fpr=0.1):
    """Pallas TPU CustomLoss.forward.

    outputs: (N,) or (N, 1) float probabilities in [0, 1]
    labels : (N,) {0, 1} labels (float/int/bool)
    returns: scalar float32 loss
    """
    p = jnp.reshape(outputs, (-1,))
    y = jnp.reshape(labels, (-1,))
    n = p.shape[0]
    assert y.shape[0] == n and n > 0

    if not jnp.issubdtype(p.dtype, jnp.floating):
        p = p.astype(jnp.float32)
    if not jnp.issubdtype(y.dtype, jnp.floating):
        # {0,1} labels: 1 byte through the DMA instead of 4.
        y = y.astype(jnp.int8)

    rows_exact = _cdiv(n, LANES)
    small = rows_exact <= SMALL_MAX_ROWS

    if small:
        rows = _round_up(rows_exact, SUBLANES)
        tile_rows = rows
        chunk_rows = rows
        total_blocks = 1
        num_splits = 1
        inner_blocks = 1
        needs_mask = False
    else:
        rows = rows_exact
        tile_rows = min(MAX_TILE_ROWS,
                        _round_up(_cdiv(rows, NUM_CORES), CHUNK_ROWS))
        chunk_rows = CHUNK_ROWS
        total_blocks = _cdiv(rows, tile_rows)
        num_splits = min(NUM_CORES, total_blocks)
        inner_blocks = _cdiv(total_blocks, num_splits)
        needs_mask = (total_blocks * tile_rows != rows) or \
                     (num_splits * inner_blocks != total_blocks)

    total = rows * LANES
    if total != n:
        # Unavoidable copy only for non-128-aligned N: pad with p=0, y=0
        # (both contribute 0 to the BCE sum and the FP count).  Fold a bf16
        # downcast of f32 {0,1} labels into the same pass so XLA fuses them.
        p = jnp.pad(p, (0, total - n))
        y = jnp.pad(y, (0, total - n))
        if y.dtype == jnp.float32:
            y = y.astype(jnp.bfloat16)
    # else: no pad, no copy — the reshape below is metadata only.

    p2 = p.reshape(rows, LANES)
    y2 = y.reshape(rows, LANES)

    kernel = _make_kernel(rows, tile_rows, chunk_rows, needs_mask,
                          jnp.issubdtype(y2.dtype, jnp.floating))

    def in_map(c, i):
        # Clamp so the DMA stays in bounds; duplicated (clamped) blocks are
        # fully masked out inside the kernel.
        return (jnp.minimum(c * inner_blocks + i, total_blocks - 1), 0)

    def out_map(c, i):
        return (c, 0, 0)

    bytes_accessed = (total * (p2.dtype.itemsize + y2.dtype.itemsize)
                      + 2 * num_splits * SUBLANES * LANES * 4)
    cost = pl.CostEstimate(flops=12 * n, transcendentals=n,
                           bytes_accessed=bytes_accessed)

    part_shape = jax.ShapeDtypeStruct((num_splits, SUBLANES, LANES), jnp.float32)
    bce_part, fp_part = pl.pallas_call(
        kernel,
        out_shape=(part_shape, part_shape),
        grid_spec=pltpu.PrefetchScalarGridSpec(
            num_scalar_prefetch=0,
            grid=(num_splits, inner_blocks),
            in_specs=[
                pl.BlockSpec((tile_rows, LANES), in_map),
                pl.BlockSpec((tile_rows, LANES), in_map),
            ],
            out_specs=[
                pl.BlockSpec((1, SUBLANES, LANES), out_map),
                pl.BlockSpec((1, SUBLANES, LANES), out_map),
            ],
        ),
        compiler_params=pltpu.CompilerParams(
            dimension_semantics=("parallel", "arbitrary"),
            vmem_limit_bytes=32 * 1024 * 1024,   # > v5e's 16 MiB default scoped VMEM
        ),
        cost_estimate=cost,
    )(p2, y2)

    # fpr is nonlinear in fp_sum, so per-core partials are combined here.
    n_f = jnp.float32(n)
    bce_loss = -jnp.sum(bce_part) / n_f
    fp_sum = jnp.sum(fp_part)
    fpr = fp_sum / (n_f + fp_sum + jnp.float32(1e-7))
    return bce_loss + jnp.float32(lambda_fpr) * (fpr - jnp.float32(1e-4)) ** 2


def _reference(outputs, labels, lambda_fpr=0.1):
    p = jnp.reshape(outputs, (-1,)).astype(jnp.float32)
    yv = jnp.reshape(labels, (-1,)).astype(jnp.float32)
    bce = jnp.mean(-(yv * jnp.maximum(jnp.log(p), -100.0)
                     + (1.0 - yv) * jnp.maximum(jnp.log(1.0 - p), -100.0)))
    pred = (p >= 0.5).astype(jnp.float32)
    fp = jnp.sum(((pred == 1.0) & (yv == 0.0)).astype(jnp.float32))
    tn = jnp.float32(yv.shape[0])
    fpr = fp / (tn + fp + 1e-07)
    return bce + lambda_fpr * (fpr - 1e-4) ** 2


if __name__ == "__main__":
    key = jax.random.PRNGKey(0)
    loss_fn = jax.jit(custom_loss)

    # Primary small example (typical module use: (N, 1) probabilities).
    k1, k2 = jax.random.split(key)
    N = 200
    outputs = jax.nn.sigmoid(jax.random.normal(k1, (N, 1), dtype=jnp.float32))
    labels = (jax.random.uniform(k2, (N,)) > 0.5).astype(jnp.float32)
    loss = loss_fn(outputs, labels)
    jax.block_until_ready(loss)
    ref = _reference(outputs, labels)
    assert jnp.allclose(loss, ref, rtol=1e-4, atol=1e-5), (loss, ref)

    # Exercise the large-N path: multi-block grid, 2-way core split, in-kernel
    # chunk loop, ragged-tail masking and the fused pad + bf16 label downcast.
    for N in (262144, 262921):
        k1, k2, key = jax.random.split(key, 3)
        outputs = jax.nn.sigmoid(jax.random.normal(k1, (N, 1), dtype=jnp.float32))
        labels = (jax.random.uniform(k2, (N,)) > 0.5).astype(jnp.float32)
        loss = loss_fn(outputs, labels)
        jax.block_until_ready(loss)
        ref = _reference(outputs, labels)
        assert jnp.allclose(loss, ref, rtol=1e-4, atol=1e-5), (N, loss, ref)

    print("KERNEL_OK")
</pallas_src>

<mosaic_0001>
module attributes {stable_mosaic.version = 11 : i64} {
  func.func @kernel(%arg0: i32, %arg1: i32, %arg2: memref<8x128xf32, #tpu.memory_space<vmem>>, %arg3: memref<8x128xbf16, #tpu.memory_space<vmem>>, %arg4: memref<1x8x128xf32, #tpu.memory_space<vmem>>, %arg5: memref<1x8x128xf32, #tpu.memory_space<vmem>>) attributes {dimension_semantics = [#tpu.dimension_semantics<parallel>, #tpu.dimension_semantics<arbitrary>], iteration_bounds = array<i64: 1, 1>, scalar_prefetch = 0 : i64, scratch_operands = 0 : i64, tpu.core_type = #tpu.core_type<tc>, window_params = [{transform_indices = @transform_0, window_bounds = array<i64: 8, 128>}, {transform_indices = @transform_1, window_bounds = array<i64: 8, 128>}, {transform_indices = @transform_2, window_bounds = array<i64: 1, 8, 128>}, {transform_indices = @transform_3, window_bounds = array<i64: 1, 8, 128>}]} {
    %c0_i32 = arith.constant 0 : i32
    %0 = arith.cmpi eq, %arg1, %c0_i32 : i32
    %1 = arith.extui %0 : i1 to i32
    %c0_i32_0 = arith.constant 0 : i32
    %2 = arith.cmpi ne, %1, %c0_i32_0 : i32
    scf.if %2 {
      %cst_23 = arith.constant 0.000000e+00 : f32
      %39 = vector.broadcast %cst_23 : f32 to vector<1x8x128xf32>
      %c0_24 = arith.constant 0 : index
      %c0_25 = arith.constant 0 : index
      %c0_26 = arith.constant 0 : index
      %40 = vector.load %arg4[%c0_24, %c0_25, %c0_26] : memref<1x8x128xf32, #tpu.memory_space<vmem>>, vector<1x8x128xf32>
      tpu.vector_store %arg4[%c0_24, %c0_25, %c0_26], %39 {strides = array<i32>} : memref<1x8x128xf32, #tpu.memory_space<vmem>>, vector<1x8x128xf32>,
      %cst_27 = arith.constant 0.000000e+00 : f32
      %41 = vector.broadcast %cst_27 : f32 to vector<1x8x128xf32>
      %c0_28 = arith.constant 0 : index
      %c0_29 = arith.constant 0 : index
      %c0_30 = arith.constant 0 : index
      %42 = vector.load %arg5[%c0_28, %c0_29, %c0_30] : memref<1x8x128xf32, #tpu.memory_space<vmem>>, vector<1x8x128xf32>
      tpu.vector_store %arg5[%c0_28, %c0_29, %c0_30], %41 {strides = array<i32>} : memref<1x8x128xf32, #tpu.memory_space<vmem>>, vector<1x8x128xf32>,
    } else {
    }
    %cst = arith.constant 0.000000e+00 : f32
    %3 = vector.broadcast %cst : f32 to vector<8x128xf32>
    %c0 = arith.constant 0 : index
    %c0_1 = arith.constant 0 : index
    %4 = vector.load %arg2[%c0, %c0_1] : memref<8x128xf32, #tpu.memory_space<vmem>>, vector<8x128xf32>
    %c0_2 = arith.constant 0 : index
    %c0_3 = arith.constant 0 : index
    %5 = vector.load %arg3[%c0_2, %c0_3] : memref<8x128xbf16, #tpu.memory_space<vmem>>, vector<8x128xbf16>
    %6 = arith.extf %5 : vector<8x128xbf16> to vector<8x128xf32>
    %cst_4 = arith.constant 5.000000e-01 : f32
    %7 = vector.broadcast %cst_4 : f32 to vector<8x128xf32>
    %8 = arith.cmpf ogt, %6, %7 : vector<8x128xf32>
    %cst_5 = arith.constant 1.000000e+00 : f32
    %9 = vector.broadcast %cst_5 : f32 to vector<8x128xf32>
    %10 = arith.subf %9, %4 : vector<8x128xf32>
    %11 = arith.select %8, %4, %10 : vector<8x128xi1>, vector<8x128xf32>
    %cst_6 = arith.constant 5.000000e-01 : f32
    %12 = vector.broadcast %cst_6 : f32 to vector<8x128xf32>
    %13 = arith.cmpf oge, %4, %12 : vector<8x128xf32>
    %cst_7 = arith.constant dense<true> : vector<8x128xi1>
    %14 = arith.xori %8, %cst_7 : vector<8x128xi1>
    %15 = arith.andi %13, %14 : vector<8x128xi1>
    %16 = math.log %11 : vector<8x128xf32>
    %cst_8 = arith.constant -1.000000e+02 : f32
    %17 = vector.broadcast %cst_8 : f32 to vector<8x128xf32>
    %18 = arith.maximumf %16, %17 : vector<8x128xf32>
    %19 = arith.extui %15 : vector<8x128xi1> to vector<8x128xi32>
    %20 = arith.sitofp %19 : vector<8x128xi32> to vector<8x128xf32>
    %21 = vector.shape_cast %18 : vector<8x128xf32> to vector<1x8x128xf32>
    %cst_9 = arith.constant dense<0.000000e+00> : vector<8x128xf32>
    %22 = vector.multi_reduction <add>, %21, %cst_9 [0] : vector<1x8x128xf32> to vector<8x128xf32>
    %23 = arith.addf %3, %22 : vector<8x128xf32>
    %24 = vector.shape_cast %20 : vector<8x128xf32> to vector<1x8x128xf32>
    %cst_10 = arith.constant dense<0.000000e+00> : vector<8x128xf32>
    %25 = vector.multi_reduction <add>, %24, %cst_10 [0] : vector<1x8x128xf32> to vector<8x128xf32>
    %26 = arith.addf %3, %25 : vector<8x128xf32>
    %c0_11 = arith.constant 0 : index
    %c0_12 = arith.constant 0 : index
    %c0_13 = arith.constant 0 : index
    %27 = vector.load %arg4[%c0_11, %c0_12, %c0_13] : memref<1x8x128xf32, #tpu.memory_space<vmem>>, vector<1x8x128xf32>
    %28 = vector.shape_cast %27 : vector<1x8x128xf32> to vector<8x128xf32>
    %29 = arith.addf %28, %23 : vector<8x128xf32>
    %c0_14 = arith.constant 0 : index
    %c0_15 = arith.constant 0 : index
    %c0_16 = arith.constant 0 : index
    %30 = vector.load %arg4[%c0_14, %c0_15, %c0_16] : memref<1x8x128xf32, #tpu.memory_space<vmem>>, vector<1x8x128xf32>
    %31 = vector.shape_cast %30 : vector<1x8x128xf32> to vector<8x128xf32>
    %32 = vector.shape_cast %29 : vector<8x128xf32> to vector<1x8x128xf32>
    tpu.vector_store %arg4[%c0_14, %c0_15, %c0_16], %32 {strides = array<i32>} : memref<1x8x128xf32, #tpu.memory_space<vmem>>, vector<1x8x128xf32>,
    %c0_17 = arith.constant 0 : index
    %c0_18 = arith.constant 0 : index
    %c0_19 = arith.constant 0 : index
    %33 = vector.load %arg5[%c0_17, %c0_18, %c0_19] : memref<1x8x128xf32, #tpu.memory_space<vmem>>, vector<1x8x128xf32>
    %34 = vector.shape_cast %33 : vector<1x8x128xf32> to vector<8x128xf32>
    %35 = arith.addf %34, %26 : vector<8x128xf32>
    %c0_20 = arith.constant 0 : index
    %c0_21 = arith.constant 0 : index
    %c0_22 = arith.constant 0 : index
    %36 = vector.load %arg5[%c0_20, %c0_21, %c0_22] : memref<1x8x128xf32, #tpu.memory_space<vmem>>, vector<1x8x128xf32>
    %37 = vector.shape_cast %36 : vector<1x8x128xf32> to vector<8x128xf32>
    %38 = vector.shape_cast %35 : vector<8x128xf32> to vector<1x8x128xf32>
    tpu.vector_store %arg5[%c0_20, %c0_21, %c0_22], %38 {strides = array<i32>} : memref<1x8x128xf32, #tpu.memory_space<vmem>>, vector<1x8x128xf32>,
    return
  }
  func.func @transform_0(%arg0: i32, %arg1: i32) -> (i32, i32) {
    %c1_i32 = arith.constant 1 : i32
    %0 = arith.muli %arg0, %c1_i32 : i32
    %1 = arith.addi %0, %arg1 : i32
    %c0_i32 = arith.constant 0 : i32
    %2 = arith.minsi %1, %c0_i32 : i32
    %c0_i32_0 = arith.constant 0 : i32
    %c0_i32_1 = arith.constant 0 : i32
    return %2, %c0_i32_0 : i32, i32
  }
  func.func @transform_1(%arg0: i32, %arg1: i32) -> (i32, i32) {
    %c1_i32 = arith.constant 1 : i32
    %0 = arith.muli %arg0, %c1_i32 : i32
    %1 = arith.addi %0, %arg1 : i32
    %c0_i32 = arith.constant 0 : i32
    %2 = arith.minsi %1, %c0_i32 : i32
    %c0_i32_0 = arith.constant 0 : i32
    %c0_i32_1 = arith.constant 0 : i32
    return %2, %c0_i32_0 : i32, i32
  }
  func.func @transform_2(%arg0: i32, %arg1: i32) -> (i32, i32, i32) {
    %c0_i32 = arith.constant 0 : i32
    %c0_i32_0 = arith.constant 0 : i32
    %c0_i32_1 = arith.constant 0 : i32
    return %arg0, %c0_i32, %c0_i32_0 : i32, i32, i32
  }
  func.func @transform_3(%arg0: i32, %arg1: i32) -> (i32, i32, i32) {
    %c0_i32 = arith.constant 0 : i32
    %c0_i32_0 = arith.constant 0 : i32
    %c0_i32_1 = arith.constant 0 : i32
    return %arg0, %c0_i32, %c0_i32_0 : i32, i32, i32
  }
}

</mosaic_0001>

<llo_original>
// kernel: custom_loss.1
$region0: #{custom_loss.1}
  #allocation0 [shape = 'u32[]', space=smem, size = 0x4, offset = 0x4, fixed_abs, tag = 'smem constant byte address 0x4 - core index']
  #allocation1 [shape = 'u32[144,128]{1,0:T(1,128)}', space=vmem, size = 0x12000, scoped, tag = 'internal scratch']
  %s0 = inlined_call_operand.vmem [shape: f32[8,128], index: 0, kind: input, shape index: {}]
  %s1 = inlined_call_operand.vmem [shape: bf16[8,128], index: 1, kind: input, shape index: {}]
  %s2 = inlined_call_operand.vmem [shape: f32[1,8,128], index: 2, kind: output, shape index: {0}]
  %s3 = inlined_call_operand.vmem [shape: f32[1,8,128], index: 3, kind: output, shape index: {1}]
  %4 = xla_tuple %s2, %s3
  %s5 = sld [smem:[#allocation0]]
  $region30: #{custom_loss.1} parent=0
    _
  %s7 = ssub.s32 1, %s5
  %s8 = scalar_select 0, %s7, %s5
  // Predicated region
  $region2: #{custom_loss.1} parent=0 // pred_check
    _
  $region3: #{custom_loss.1} parent=0 // pred_check_branch
    %10 = sbr.rel (0) target = $region5
  $region4: #{custom_loss.1} parent=0 // pred_region
    %s11 = sadd.s32 0, 0
    %p12 = scmp.lt.s32.totalorder %s11, 0
    %s13 = scalar_select %p12, %s11, 0
    %p14 = scmp.lt.s32.totalorder %s13, 0
    %s15 = scalar_select %p14, %s13, 0
    %s16 = smul.addr %s15, 8
    %s17 = scalar_lea.vmem %s0, %s16
    %s18 = sadd.s32 0, 0
    %p19 = scmp.lt.s32.totalorder %s18, 0
    %s20 = scalar_select %p19, %s18, 0
  $region5: #{custom_loss.1} parent=0 // pred_fallthru
    _
  // Predicated region
  $region6: #{custom_loss.1} parent=0 // pred_check
    _
  $region7: #{custom_loss.1} parent=0 // pred_check_branch
    %22 = sbr.rel (0) target = $region9
  $region8: #{custom_loss.1} parent=0 // pred_region
    %s23 = sadd.s32 0, 0
    %p24 = scmp.lt.s32.totalorder %s23, 0
    %s25 = scalar_select %p24, %s23, 0
    %p26 = scmp.lt.s32.totalorder %s25, 0
    %s27 = scalar_select %p26, %s25, 0
    %s28 = smul.addr %s27, 4
    %s29 = scalar_lea.vmem %s1, %s28
    %s30 = sadd.s32 0, 0
    %p31 = scmp.lt.s32.totalorder %s30, 0
    %s32 = scalar_select %p31, %s30, 0
  $region9: #{custom_loss.1} parent=0 // pred_fallthru
    _
  %s33 = sadd.s32 0, 0
  %p34 = scmp.lt.s32.totalorder %s33, 0
  %s35 = scalar_select %p34, %s33, 0
  %p36 = scmp.lt.s32.totalorder %s35, 0
  %s37 = scalar_select %p36, %s35, 0
  %s38 = smul.addr %s37, 8
  %s39 = scalar_lea.vmem %s0, %s38
  %s40 = sadd.s32 0, 0
  %p41 = scmp.lt.s32.totalorder %s40, 0
  %s42 = scalar_select %p41, %s40, 0
  %p43 = scmp.lt.s32.totalorder %s42, 0
  %s44 = scalar_select %p43, %s42, 0
  %s45 = smul.addr %s44, 4
  %s46 = scalar_lea.vmem %s1, %s45
  %s47 = sadd.s32 0, 0
  %p48 = scmp.lt.s32.totalorder %s47, 0
  %s49 = scalar_select %p48, %s47, 0
  %p50 = scmp.lt.s32.totalorder %s49, 0
  %s51 = scalar_select %p50, %s49, 0
  %s52 = smul.addr %s51, 8
  %s53 = scalar_lea.vmem %s0, %s52
  %s54 = sadd.s32 0, 0
  %p55 = scmp.lt.s32.totalorder %s54, 0
  %s56 = scalar_select %p55, %s54, 0
  %s57 = sadd.s32 0, 0
  %p58 = scmp.lt.s32.totalorder %s57, 0
  %s59 = scalar_select %p58, %s57, 0
  %p60 = scmp.lt.s32.totalorder %s59, 0
  %s61 = scalar_select %p60, %s59, 0
  %s62 = smul.addr %s61, 4
  %s63 = scalar_lea.vmem %s1, %s62
  %s64 = sadd.s32 0, 0
  %p65 = scmp.lt.s32.totalorder %s64, 0
  %s66 = scalar_select %p65, %s64, 0
  %p67 = scmp.eq.s32.totalorder 0, 0
  // Predicated region
  $region10: #{custom_loss.1} parent=0 // pred_check
    %p68 = pneg %p67
  $region11: #{custom_loss.1} parent=0 // pred_check_branch
    %70 = sbr.rel (%p68) target = $region13
  $region12: #{custom_loss.1} parent=0 // pred_region
    %71 = vst [vmem:[%s2] sm:$0xff] 0.0
    %72 = vst [vmem:[%s3] sm:$0xff] 0.0
  $region13: #{custom_loss.1} parent=0 // pred_fallthru
    _
  %v73 = vld [vmem:[%s53] sm:$0xff]
  %v74 = vld [vmem:[%s63] sm:$0xf]
  %v75 = vunpack.c.l.bf16 %v74
  %vm76 = vcmp.gt.f32.partialorder %v75, 0.5
  %v77 = vsub.f32 1.0, %v73
  %v78 = vsel %vm76, %v73, %v77
  %vm79 = vcmp.ge.f32.partialorder %v73, 0.5
  %vm80 = vmxor %vm76, 1
  %vm81 = vmand %vm79, %vm80
  %v82 = vlog2.pop %v78
  %v83 = vmul.f32 %v82, 0.6931472
  %v84 = vmax.f32 %v83, -100.0
  %v85 = vsel %vm81, 1, 0
  %v86 = vcvt.s32.f32 %v85
  %v87 = vadd.f32 %v84, 0.0
  %v88 = vadd.f32 %v87, 0.0
  %v89 = vadd.f32 %v86, 0.0
  %v90 = vadd.f32 %v89, 0.0
  %v91 = vld [vmem:[%s2] sm:$0xff]
  %v92 = vadd.f32 %v91, %v88
  %93 = vst [vmem:[%s2] sm:$0xff] %v92
  %v94 = vld [vmem:[%s3] sm:$0xff]
  %v95 = vadd.f32 %v94, %v90
  %96 = vst [vmem:[%s3] sm:$0xff] %v95
  // Predicated region
  $region14: #{custom_loss.1} parent=0 // pred_check
    _
  $region15: #{custom_loss.1} parent=0 // pred_check_branch
    %98 = sbr.rel (0) target = $region17
  $region16: #{custom_loss.1} parent=0 // pred_region
    _
  $region17: #{custom_loss.1} parent=0 // pred_fallthru
    _
  // Predicated region
  $region18: #{custom_loss.1} parent=0 // pred_check
    _
  $region19: #{custom_loss.1} parent=0 // pred_check_branch
    %100 = sbr.rel (0) target = $region21
  $region20: #{custom_loss.1} parent=0 // pred_region
    _
  $region21: #{custom_loss.1} parent=0 // pred_fallthru
    _
  // Predicated region
  $region22: #{custom_loss.1} parent=0 // pred_check
    _
  $region23: #{custom_loss.1} parent=0 // pred_check_branch
    %102 = sbr.rel (0) target = $region25
  $region24: #{custom_loss.1} parent=0 // pred_region
    _
  $region25: #{custom_loss.1} parent=0 // pred_fallthru
    _
  // Predicated region
  $region26: #{custom_loss.1} parent=0 // pred_check
    _
  $region27: #{custom_loss.1} parent=0 // pred_check_branch
    %104 = sbr.rel (0) target = $region29
  $region28: #{custom_loss.1} parent=0 // pred_region
    _
  $region29: #{custom_loss.1} parent=0 // pred_fallthru
    _

</llo_original>
